<compile_context>
chip_gen: v6e
topology: v6e:2x2x1
jax: 0.10.0
libtpu: 0.0.40
codegen_flags: <defaults>
</compile_context>

<pallas_src>
import functools

import jax
import jax.numpy as jnp
from jax.experimental import pallas as pl
from jax.experimental.pallas import tpu as pltpu


def _round_up(v, m):
    return (v + m - 1) // m * m


def mlp_kernel(x_ref, w1_ref, b1_ref, w2_ref, b2_ref, w3_ref, b3_ref, o_ref):
    wdt = w1_ref.dtype  # weight storage dtype (f32 or bf16); accumulation is always f32

    # Layer 1: Linear + ReLU (MXU matmul, f32 accumulation; bias/ReLU in f32)
    h1 = jnp.dot(x_ref[...].astype(wdt), w1_ref[...],
                 preferred_element_type=jnp.float32)
    h1 = jnp.maximum(h1 + b1_ref[...], 0.0)

    # Layer 2: Linear + ReLU
    h2 = jnp.dot(h1.astype(wdt), w2_ref[...],
                 preferred_element_type=jnp.float32)
    h2 = jnp.maximum(h2 + b2_ref[...], 0.0)

    # Layer 3: Linear + softmax over the (lane-padded) last dim.
    # Padded bias columns are -1e30, so exp() underflows to 0 there and the softmax
    # over the real columns is unchanged.
    logits = jnp.dot(h2.astype(wdt), w3_ref[...],
                     preferred_element_type=jnp.float32)
    logits = logits + b3_ref[...]
    m = jnp.max(logits, axis=-1, keepdims=True)
    e = jnp.exp(logits - m)
    denom = jnp.sum(e, axis=-1, keepdims=True)
    o_ref[...] = (e * pl.reciprocal(denom, approx=False)).astype(o_ref.dtype)


def network_forward(x, params, *, weight_dtype=jnp.float32, tm=256):
    """x: (B, 42) f32.  params: w1,b1,w2,b2,w3,b3 in (in,out)/(1,out) layout.

    weight_dtype: jnp.float32 (exact) or jnp.bfloat16 (fast MXU path on v6e/v7x).
    tm: max rows per batch tile (use 128 on v5e, 256 on v6e/v7x).
    """
    w1, b1 = params["w1"], params["b1"]
    w2, b2 = params["w2"], params["b2"]
    w3, b3 = params["w3"], params["b3"]

    B, K = x.shape
    H1 = w1.shape[1]           # 512
    H2 = w2.shape[1]           # 256
    F_out = w3.shape[1]

    # Lane/sublane-friendly padded dims.
    K_pad = _round_up(K, 128)        # 42  -> 128 (aligned MXU K feed)
    F_pad = _round_up(F_out, 128)    # 10  -> 128 (lane-dense output stores)

    # Batch tiling: TM rows per grid step, batch zero-padded to a multiple of TM.
    TM = min(tm, _round_up(B, 8))
    B_pad = _round_up(B, TM)
    grid = (pl.cdiv(B_pad, TM),)

    f32 = jnp.float32
    # Zero-pad inputs / weights; biases stay f32 (elementwise math is f32 everywhere).
    x_p = jnp.zeros((B_pad, K_pad), f32).at[:B, :K].set(x.astype(f32))
    w1_p = jnp.zeros((K_pad, H1), f32).at[:K, :].set(w1).astype(weight_dtype)
    w2_p = w2.astype(weight_dtype)
    w3_p = jnp.zeros((H2, F_pad), f32).at[:, :F_out].set(w3).astype(weight_dtype)
    b1_p = b1.astype(f32)
    b2_p = b2.astype(f32)
    b3_p = jnp.full((1, F_pad), -1e30, f32).at[:, :F_out].set(b3.astype(f32))

    resident = lambda shape: pl.BlockSpec(shape, lambda i: (0,) * len(shape))

    flops = 2 * B_pad * (K_pad * H1 + H1 * H2 + H2 * F_pad)
    bytes_accessed = 4 * (B_pad * K_pad + B_pad * F_pad) + sum(
        a.size * a.dtype.itemsize for a in (w1_p, b1_p, w2_p, b2_p, w3_p, b3_p))

    out_padded = pl.pallas_call(
        mlp_kernel,
        out_shape=jax.ShapeDtypeStruct((B_pad, F_pad), jnp.float32),
        grid=grid,
        in_specs=[
            pl.BlockSpec((TM, K_pad), lambda i: (i, 0)),   # x: tiled over batch
            resident(w1_p.shape), resident(b1_p.shape),    # weights/biases: resident
            resident(w2_p.shape), resident(b2_p.shape),
            resident(w3_p.shape), resident(b3_p.shape),
        ],
        out_specs=pl.BlockSpec((TM, F_pad), lambda i: (i, 0)),
        compiler_params=pltpu.CompilerParams(
            dimension_semantics=("parallel",),     # 2-TC sharding on v7x; no-op elsewhere
            vmem_limit_bytes=16 * 1024 * 1024,     # working set is ~1-2 MiB
        ),
        cost_estimate=pl.CostEstimate(
            flops=flops,
            transcendentals=B_pad * F_pad,
            bytes_accessed=bytes_accessed,
        ),
    )(x_p, w1_p, b1_p, w2_p, b2_p, w3_p, b3_p)

    return out_padded[:B, :F_out]


def init_params(key, num_features):
    """Deterministic init mirroring nn.Linear default (uniform +-1/sqrt(fan_in)).
    Weights stored as (in, out) = transpose of PyTorch's (out, in)."""
    def linear(key, fan_in, fan_out):
        kw, kb = jax.random.split(key)
        bound = 1.0 / jnp.sqrt(fan_in)
        w = jax.random.uniform(kw, (fan_in, fan_out), jnp.float32, -bound, bound)
        b = jax.random.uniform(kb, (1, fan_out), jnp.float32, -bound, bound)
        return w, b

    k1, k2, k3 = jax.random.split(key, 3)
    w1, b1 = linear(k1, 42, 512)
    w2, b2 = linear(k2, 512, 256)
    w3, b3 = linear(k3, 256, num_features)
    return {"w1": w1, "b1": b1, "w2": w2, "b2": b2, "w3": w3, "b3": b3}


def _reference(x, params):
    h1 = jnp.maximum(x @ params["w1"] + params["b1"], 0.0)
    h2 = jnp.maximum(h1 @ params["w2"] + params["b2"], 0.0)
    logits = h2 @ params["w3"] + params["b3"]
    return jax.nn.softmax(logits, axis=-1)


if __name__ == "__main__":
    key = jax.random.PRNGKey(0)
    k_param, k_x, k_x2 = jax.random.split(key, 3)

    num_features = 10   # `num_features` from Network.__init__
    batch = 8

    params = init_params(k_param, num_features)
    x = jax.random.normal(k_x, (batch, 42), jnp.float32)

    # f32 path (exact): single batch tile.
    out = jax.block_until_ready(network_forward(x, params))
    ref = _reference(x, params)
    assert out.shape == (batch, num_features)
    assert jnp.allclose(out, ref, atol=1e-5, rtol=1e-5)
    assert jnp.allclose(jnp.sum(out, axis=-1), 1.0, atol=1e-5)

    # f32 path with multiple grid steps (B=40, TM=8 -> grid=(5,)) to exercise tiling.
    x2 = jax.random.normal(k_x2, (40, 42), jnp.float32)
    out2 = jax.block_until_ready(network_forward(x2, params, tm=8))
    ref2 = _reference(x2, params)
    assert out2.shape == (40, num_features)
    assert jnp.allclose(out2, ref2, atol=1e-5, rtol=1e-5)

    # bf16-weight fast path (v6e/v7x MXU-friendly); looser tolerance vs f32 reference.
    out_bf16 = jax.block_until_ready(
        network_forward(x, params, weight_dtype=jnp.bfloat16))
    assert out_bf16.shape == (batch, num_features)
    assert jnp.allclose(jnp.sum(out_bf16, axis=-1), 1.0, atol=1e-3)
    assert jnp.allclose(out_bf16, ref, atol=5e-2)

    print("KERNEL_OK")
</pallas_src>

<mosaic_0001>
module attributes {stable_mosaic.version = 11 : i64} {
  func.func @mlp_kernel(%arg0: i32, %arg1: memref<8x128xf32, #tpu.memory_space<vmem>>, %arg2: memref<128x512xf32, #tpu.memory_space<vmem>>, %arg3: memref<1x512xf32, #tpu.memory_space<vmem>>, %arg4: memref<512x256xf32, #tpu.memory_space<vmem>>, %arg5: memref<1x256xf32, #tpu.memory_space<vmem>>, %arg6: memref<256x128xf32, #tpu.memory_space<vmem>>, %arg7: memref<1x128xf32, #tpu.memory_space<vmem>>, %arg8: memref<8x128xf32, #tpu.memory_space<vmem>>) attributes {dimension_semantics = [#tpu.dimension_semantics<parallel>], iteration_bounds = array<i64: 1>, scalar_prefetch = 0 : i64, scratch_operands = 0 : i64, tpu.core_type = #tpu.core_type<tc>, window_params = [{transform_indices = @transform_0, window_bounds = array<i64: 8, 128>}, {pipeline_mode = #tpu.pipeline_mode<synchronous>, transform_indices = @transform_1, window_bounds = array<i64: 128, 512>}, {pipeline_mode = #tpu.pipeline_mode<synchronous>, transform_indices = @transform_2, window_bounds = array<i64: 1, 512>}, {pipeline_mode = #tpu.pipeline_mode<synchronous>, transform_indices = @transform_3, window_bounds = array<i64: 512, 256>}, {pipeline_mode = #tpu.pipeline_mode<synchronous>, transform_indices = @transform_4, window_bounds = array<i64: 1, 256>}, {pipeline_mode = #tpu.pipeline_mode<synchronous>, transform_indices = @transform_5, window_bounds = array<i64: 256, 128>}, {pipeline_mode = #tpu.pipeline_mode<synchronous>, transform_indices = @transform_6, window_bounds = array<i64: 1, 128>}, {transform_indices = @transform_7, window_bounds = array<i64: 8, 128>}]} {
    %c0 = arith.constant 0 : index
    %c0_0 = arith.constant 0 : index
    %0 = vector.load %arg1[%c0, %c0_0] : memref<8x128xf32, #tpu.memory_space<vmem>>, vector<8x128xf32>
    %c0_1 = arith.constant 0 : index
    %c0_2 = arith.constant 0 : index
    %1 = vector.load %arg2[%c0_1, %c0_2] : memref<128x512xf32, #tpu.memory_space<vmem>>, vector<128x512xf32>
    %cst = arith.constant dense<0.000000e+00> : vector<8x512xf32>
    %2 = tpu.matmul %0, %1, %cst {dimension_numbers = #tpu.dot_dimension_numbers<[1], [0], [0], [1], [0, 0, 1, 1], [], []>} : vector<8x128xf32>, vector<128x512xf32>, vector<8x512xf32> -> vector<8x512xf32>
    %c0_3 = arith.constant 0 : index
    %c0_4 = arith.constant 0 : index
    %3 = vector.load %arg3[%c0_3, %c0_4] : memref<1x512xf32, #tpu.memory_space<vmem>>, vector<1x512xf32>
    %4 = vector.broadcast %3 : vector<1x512xf32> to vector<8x512xf32>
    %5 = arith.addf %2, %4 : vector<8x512xf32>
    %cst_5 = arith.constant 0.000000e+00 : f32
    %6 = vector.broadcast %cst_5 : f32 to vector<8x512xf32>
    %7 = arith.maximumf %5, %6 : vector<8x512xf32>
    %c0_6 = arith.constant 0 : index
    %c0_7 = arith.constant 0 : index
    %8 = vector.load %arg4[%c0_6, %c0_7] : memref<512x256xf32, #tpu.memory_space<vmem>>, vector<512x256xf32>
    %cst_8 = arith.constant dense<0.000000e+00> : vector<8x256xf32>
    %9 = tpu.matmul %7, %8, %cst_8 {dimension_numbers = #tpu.dot_dimension_numbers<[1], [0], [0], [1], [0, 0, 1, 1], [], []>} : vector<8x512xf32>, vector<512x256xf32>, vector<8x256xf32> -> vector<8x256xf32>
    %c0_9 = arith.constant 0 : index
    %c0_10 = arith.constant 0 : index
    %10 = vector.load %arg5[%c0_9, %c0_10] : memref<1x256xf32, #tpu.memory_space<vmem>>, vector<1x256xf32>
    %11 = vector.broadcast %10 : vector<1x256xf32> to vector<8x256xf32>
    %12 = arith.addf %9, %11 : vector<8x256xf32>
    %cst_11 = arith.constant 0.000000e+00 : f32
    %13 = vector.broadcast %cst_11 : f32 to vector<8x256xf32>
    %14 = arith.maximumf %12, %13 : vector<8x256xf32>
    %c0_12 = arith.constant 0 : index
    %c0_13 = arith.constant 0 : index
    %15 = vector.load %arg6[%c0_12, %c0_13] : memref<256x128xf32, #tpu.memory_space<vmem>>, vector<256x128xf32>
    %cst_14 = arith.constant dense<0.000000e+00> : vector<8x128xf32>
    %16 = tpu.matmul %14, %15, %cst_14 {dimension_numbers = #tpu.dot_dimension_numbers<[1], [0], [0], [1], [0, 0, 1, 1], [], []>} : vector<8x256xf32>, vector<256x128xf32>, vector<8x128xf32> -> vector<8x128xf32>
    %c0_15 = arith.constant 0 : index
    %c0_16 = arith.constant 0 : index
    %17 = vector.load %arg7[%c0_15, %c0_16] : memref<1x128xf32, #tpu.memory_space<vmem>>, vector<1x128xf32>
    %18 = vector.broadcast %17 : vector<1x128xf32> to vector<8x128xf32>
    %19 = arith.addf %16, %18 : vector<8x128xf32>
    %cst_17 = arith.constant dense<0xFF800000> : vector<8xf32>
    %20 = vector.multi_reduction <maximumf>, %19, %cst_17 [1] : vector<8x128xf32> to vector<8xf32>
    %21 = vector.shape_cast %20 : vector<8xf32> to vector<8x1xf32>
    %22 = vector.broadcast %21 : vector<8x1xf32> to vector<8x128xf32>
    %23 = arith.subf %19, %22 : vector<8x128xf32>
    %24 = math.exp %23 : vector<8x128xf32>
    %cst_18 = arith.constant dense<0.000000e+00> : vector<8xf32>
    %25 = vector.multi_reduction <add>, %24, %cst_18 [1] : vector<8x128xf32> to vector<8xf32>
    %26 = vector.shape_cast %25 : vector<8xf32> to vector<8x1xf32>
    %27 = tpu.reciprocal %26 : vector<8x1xf32> -> vector<8x1xf32>
    %28 = vector.broadcast %27 : vector<8x1xf32> to vector<8x128xf32>
    %29 = arith.mulf %24, %28 : vector<8x128xf32>
    %c0_19 = arith.constant 0 : index
    %c0_20 = arith.constant 0 : index
    %30 = vector.load %arg8[%c0_19, %c0_20] : memref<8x128xf32, #tpu.memory_space<vmem>>, vector<8x128xf32>
    tpu.vector_store %arg8[%c0_19, %c0_20], %29 {strides = array<i32>} : memref<8x128xf32, #tpu.memory_space<vmem>>, vector<8x128xf32>,
    return
  }
  func.func @transform_0(%arg0: i32) -> (i32, i32) {
    %c0_i32 = arith.constant 0 : i32
    %c0_i32_0 = arith.constant 0 : i32
    return %arg0, %c0_i32 : i32, i32
  }
  func.func @transform_1(%arg0: i32) -> (i32, i32) {
    %c0_i32 = arith.constant 0 : i32
    %c0_i32_0 = arith.constant 0 : i32
    %c0_i32_1 = arith.constant 0 : i32
    return %c0_i32, %c0_i32_0 : i32, i32
  }
  func.func @transform_2(%arg0: i32) -> (i32, i32) {
    %c0_i32 = arith.constant 0 : i32
    %c0_i32_0 = arith.constant 0 : i32
    %c0_i32_1 = arith.constant 0 : i32
    return %c0_i32, %c0_i32_0 : i32, i32
  }
  func.func @transform_3(%arg0: i32) -> (i32, i32) {
    %c0_i32 = arith.constant 0 : i32
    %c0_i32_0 = arith.constant 0 : i32
    %c0_i32_1 = arith.constant 0 : i32
    return %c0_i32, %c0_i32_0 : i32, i32
  }
  func.func @transform_4(%arg0: i32) -> (i32, i32) {
    %c0_i32 = arith.constant 0 : i32
    %c0_i32_0 = arith.constant 0 : i32
    %c0_i32_1 = arith.constant 0 : i32
    return %c0_i32, %c0_i32_0 : i32, i32
  }
  func.func @transform_5(%arg0: i32) -> (i32, i32) {
    %c0_i32 = arith.constant 0 : i32
    %c0_i32_0 = arith.constant 0 : i32
    %c0_i32_1 = arith.constant 0 : i32
    return %c0_i32, %c0_i32_0 : i32, i32
  }
  func.func @transform_6(%arg0: i32) -> (i32, i32) {
    %c0_i32 = arith.constant 0 : i32
    %c0_i32_0 = arith.constant 0 : i32
    %c0_i32_1 = arith.constant 0 : i32
    return %c0_i32, %c0_i32_0 : i32, i32
  }
  func.func @transform_7(%arg0: i32) -> (i32, i32) {
    %c0_i32 = arith.constant 0 : i32
    %c0_i32_0 = arith.constant 0 : i32
    return %arg0, %c0_i32 : i32, i32
  }
}

</mosaic_0001>

<llo_original>
// kernel: tpu_custom_call.1
$region0: #{tpu_custom_call.1}
  #allocation0 [shape = 'u32[]', space=smem, size = 0x4, offset = 0x4, fixed_abs, tag = 'smem constant byte address 0x4 - core index']
  #allocation1 [shape = 'u32[144,128]{1,0:T(1,128)}', space=vmem, size = 0x12000, scoped, tag = 'internal scratch']
  %s0 = inlined_call_operand.hbm [shape: f32[8,128], index: 0, kind: input, shape index: {}]
  %s1 = inlined_call_operand.hbm [shape: f32[128,512], index: 1, kind: input, shape index: {}]
  %s2 = inlined_call_operand.hbm [shape: f32[1,512], index: 2, kind: input, shape index: {}]
  %s3 = inlined_call_operand.hbm [shape: f32[512,256], index: 3, kind: input, shape index: {}]
  %s4 = inlined_call_operand.vmem [shape: f32[1,256], index: 4, kind: input, shape index: {}]
  %s5 = inlined_call_operand.hbm [shape: f32[256,128], index: 5, kind: input, shape index: {}]
  %s6 = inlined_call_operand.vmem [shape: f32[1,128], index: 6, kind: input, shape index: {}]
  %s7 = inlined_call_operand.hbm [shape: f32[8,128], index: 7, kind: output, shape index: {}]
  %s8 = sld [smem:[#allocation0]]
  $region58: #{tpu_custom_call.1} parent=0
    _
  %s10 = ssub.s32 1, %s8
  %s11 = scalar_select 0, %s10, %s8
  $region1: #{tpu_custom_call.1} parent=0
    #allocation2 [shape = 'u8[4096]{0}', space=vmem, size = 0x1000, scoped, tag = 'input window, operand 0, single buffered']
    #allocation3 [shape = 's32[1]{0}', space=sflag, size = 0x4, scoped, tag = 'scoped memory for tpu_custom_call.1']
    #allocation4 [shape = 's32[1]{0}', space=sflag, size = 0x4, scoped, tag = 'scoped memory for tpu_custom_call.1']
    #allocation5 [shape = 'u8[262144]{0}', space=vmem, size = 0x40000, scoped, tag = 'input window, operand 1, single buffered']
    #allocation6 [shape = 's32[1]{0}', space=sflag, size = 0x4, scoped, tag = 'scoped memory for tpu_custom_call.1']
    #allocation7 [shape = 'u8[2048]{0}', space=vmem, size = 0x800, scoped, tag = 'input window, operand 2, single buffered']
    #allocation8 [shape = 'u8[524288]{0}', space=vmem, size = 0x80000, scoped, tag = 'input window, operand 3, single buffered']
    #allocation9 [shape = 's32[1]{0}', space=sflag, size = 0x4, scoped, tag = 'scoped memory for tpu_custom_call.1']
    #allocation10 [shape = 'u8[131072]{0}', space=vmem, size = 0x20000, scoped, tag = 'input window, operand 5, single buffered']
    #allocation11 [shape = 'u8[4096]{0}', space=vmem, size = 0x1000, scoped, tag = 'output window, operand 0, single buffered']
    %12 = vsyncpa [#allocation3], 0
    %13 = vsyncpa [#allocation6], 0
    %14 = vsyncpa [#allocation9], 0
    %15 = vsyncpa [#allocation4], 0
    // Predicated region
    $region2: #{tpu_custom_call.1} parent=1 // pred_check
      _
    $region3: #{tpu_custom_call.1} parent=1 // pred_check_branch
      %17 = sbr.rel (0) target = $region5
    $region4: #{tpu_custom_call.1} parent=1 // pred_region
      %s19 = ssub.s32 128, 128
      %20 = vsyncadd [#allocation3], %s19
      %s22 = sshll.u32 [#allocation2], 4
      %s23 = int_to_ptr.vmem [resolvable:$true] %s22
      %25 = dma.hbm_to_vmem [thread:$0]  %s0, 128, %s23, [#allocation3]
    $region5: #{tpu_custom_call.1} parent=1 // pred_fallthru
      _
    // Predicated region
    $region6: #{tpu_custom_call.1} parent=1 // pred_check
      _
    $region7: #{tpu_custom_call.1} parent=1 // pred_check_branch
      %27 = sbr.rel (0) target = $region9
    $region8: #{tpu_custom_call.1} parent=1 // pred_region
      %s29 = ssub.s32 8192, 8192
      %30 = vsyncadd [#allocation6], %s29
      %s31 = sshll.u32 [#allocation5], 4
      %s32 = int_to_ptr.vmem [resolvable:$true] %s31
      %37 = dma.hbm_to_vmem [thread:$0]  %s1, 8192, %s32, [#allocation6], 512, 512, 32
    $region9: #{tpu_custom_call.1} parent=1 // pred_fallthru
      _
    // Predicated region
    $region10: #{tpu_custom_call.1} parent=1 // pred_check
      _
    $region11: #{tpu_custom_call.1} parent=1 // pred_check_branch
      %39 = sbr.rel (0) target = $region13
    $region12: #{tpu_custom_call.1} parent=1 // pred_region
      %s41 = ssub.s32 64, 64
      %42 = vsyncadd [#allocation6], %s41
      %s44 = sshll.u32 [#allocation7], 4
      %s45 = int_to_ptr.vmem [resolvable:$true] %s44
      %47 = dma.hbm_to_vmem [thread:$0]  %s2, 64, %s45, [#allocation6]
    $region13: #{tpu_custom_call.1} parent=1 // pred_fallthru
      _
    // Predicated region
    $region14: #{tpu_custom_call.1} parent=1 // pred_check
      _
    $region15: #{tpu_custom_call.1} parent=1 // pred_check_branch
      %49 = sbr.rel (0) target = $region17
    $region16: #{tpu_custom_call.1} parent=1 // pred_region
      %s51 = ssub.s32 16384, 16384
      %52 = vsyncadd [#allocation9], %s51
      %s53 = sshll.u32 [#allocation8], 4
      %s54 = int_to_ptr.vmem [resolvable:$true] %s53
      %59 = dma.hbm_to_vmem [thread:$0]  %s3, 16384, %s54, [#allocation9], 256, 256, 16
    $region17: #{tpu_custom_call.1} parent=1 // pred_fallthru
      _
    // Predicated region
    $region18: #{tpu_custom_call.1} parent=1 // pred_check
      _
    $region19: #{tpu_custom_call.1} parent=1 // pred_check_branch
      %61 = sbr.rel (0) target = $region21
    $region20: #{tpu_custom_call.1} parent=1 // pred_region
      _
    $region21: #{tpu_custom_call.1} parent=1 // pred_fallthru
      _
    // Predicated region
    $region22: #{tpu_custom_call.1} parent=1 // pred_check
      _
    $region23: #{tpu_custom_call.1} parent=1 // pred_check_branch
      %63 = sbr.rel (0) target = $region25
    $region24: #{tpu_custom_call.1} parent=1 // pred_region
      %s65 = ssub.s32 4096, 4096
      %66 = vsyncadd [#allocation9], %s65
      %s67 = sshll.u32 [#allocation10], 4
      %s68 = int_to_ptr.vmem [resolvable:$true] %s67
      %73 = dma.hbm_to_vmem [thread:$0]  %s5, 4096, %s68, [#allocation9], 128, 128, 8
    $region25: #{tpu_custom_call.1} parent=1 // pred_fallthru
      _
    // Predicated region
    $region26: #{tpu_custom_call.1} parent=1 // pred_check
      _
    $region27: #{tpu_custom_call.1} parent=1 // pred_check_branch
      %75 = sbr.rel (0) target = $region29
    $region28: #{tpu_custom_call.1} parent=1 // pred_region
      _
    $region29: #{tpu_custom_call.1} parent=1 // pred_fallthru
      _
    // Predicated region
    $region30: #{tpu_custom_call.1} parent=1 // pred_check
      _
    $region31: #{tpu_custom_call.1} parent=1 // pred_check_branch
      %77 = sbr.rel (0) target = $region33
    $region32: #{tpu_custom_call.1} parent=1 // pred_region
      %78 = dma.done [#allocation3], 128
    $region33: #{tpu_custom_call.1} parent=1 // pred_fallthru
      _
    // Predicated region
    $region34: #{tpu_custom_call.1} parent=1 // pred_check
      _
    $region35: #{tpu_custom_call.1} parent=1 // pred_check_branch
      %80 = sbr.rel (0) target = $region37
    $region36: #{tpu_custom_call.1} parent=1 // pred_region
      %81 = dma.done [#allocation6], 8192
    $region37: #{tpu_custom_call.1} parent=1 // pred_fallthru
      _
    // Predicated region
    $region38: #{tpu_custom_call.1} parent=1 // pred_check
      _
    $region39: #{tpu_custom_call.1} parent=1 // pred_check_branch
      %83 = sbr.rel (0) target = $region41
    $region40: #{tpu_custom_call.1} parent=1 // pred_region
      %84 = dma.done [#allocation6], 64
    $region41: #{tpu_custom_call.1} parent=1 // pred_fallthru
      _
    // Predicated region
    $region42: #{tpu_custom_call.1} parent=1 // pred_check
      _
    $region43: #{tpu_custom_call.1} parent=1 // pred_check_branch
      %86 = sbr.rel (0) target = $region45
    $region44: #{tpu_custom_call.1} parent=1 // pred_region
      %87 = dma.done [#allocation9], 16384
    $region45: #{tpu_custom_call.1} parent=1 // pred_fallthru
      _
    // Predicated region
    $region46: #{tpu_custom_call.1} parent=1 // pred_check
      _
    $region47: #{tpu_custom_call.1} parent=1 // pred_check_branch
      %89 = sbr.rel (0) target = $region49
    $region48: #{tpu_custom_call.1} parent=1 // pred_region
      %90 = dma.done [#allocation9], 4096
    $region49: #{tpu_custom_call.1} parent=1 // pred_fallthru
      _
    %v91 = vld [vmem:[#allocation2] sm:$0xff]
    %v92 = vld [vmem:[#allocation5] sm:$0xff]
    %v93 = vld [vmem:[#allocation5 + $0x8] sm:$0xff]
    %v94 = vld [vmem:[#allocation5 + $0x10] sm:$0xff]
    %v95 = vld [vmem:[#allocation5 + $0x18] sm:$0xff]
    %v96 = vld [vmem:[#allocation5 + $0x20] sm:$0xff]
    %v97 = vld [vmem:[#allocation5 + $0x28] sm:$0xff]
    %v98 = vld [vmem:[#allocation5 + $0x30] sm:$0xff]
    %v99 = vld [vmem:[#allocation5 + $0x38] sm:$0xff]
    %v100 = vld [vmem:[#allocation5 + $0x40] sm:$0xff]
    %v101 = vld [vmem:[#allocation5 + $0x48] sm:$0xff]
    %v102 = vld [vmem:[#allocation5 + $0x50] sm:$0xff]
    %v103 = vld [vmem:[#allocation5 + $0x58] sm:$0xff]
    %v104 = vld [vmem:[#allocation5 + $0x60] sm:$0xff]
    %v105 = vld [vmem:[#allocation5 + $0x68] sm:$0xff]
    %v106 = vld [vmem:[#allocation5 + $0x70] sm:$0xff]
    %v107 = vld [vmem:[#allocation5 + $0x78] sm:$0xff]
    %v108 = vld [vmem:[#allocation5 + $0x80] sm:$0xff]
    %v109 = vld [vmem:[#allocation5 + $0x88] sm:$0xff]
    %v110 = vld [vmem:[#allocation5 + $0x90] sm:$0xff]
    %v111 = vld [vmem:[#allocation5 + $0x98] sm:$0xff]
    %v112 = vld [vmem:[#allocation5 + $0xa0] sm:$0xff]
    %v113 = vld [vmem:[#allocation5 + $0xa8] sm:$0xff]
    %v114 = vld [vmem:[#allocation5 + $0xb0] sm:$0xff]
    %v115 = vld [vmem:[#allocation5 + $0xb8] sm:$0xff]
    %v116 = vld [vmem:[#allocation5 + $0xc0] sm:$0xff]
    %v117 = vld [vmem:[#allocation5 + $0xc8] sm:$0xff]
    %v118 = vld [vmem:[#allocation5 + $0xd0] sm:$0xff]
    %v119 = vld [vmem:[#allocation5 + $0xd8] sm:$0xff]
    %v120 = vld [vmem:[#allocation5 + $0xe0] sm:$0xff]
    %v121 = vld [vmem:[#allocation5 + $0xe8] sm:$0xff]
    %v122 = vld [vmem:[#allocation5 + $0xf0] sm:$0xff]
    %v123 = vld [vmem:[#allocation5 + $0xf8] sm:$0xff]
    %v124 = vld [vmem:[#allocation5 + $0x100] sm:$0xff]
    %v125 = vld [vmem:[#allocation5 + $0x108] sm:$0xff]
    %v126 = vld [vmem:[#allocation5 + $0x110] sm:$0xff]
    %v127 = vld [vmem:[#allocation5 + $0x118] sm:$0xff]
    %v128 = vld [vmem:[#allocation5 + $0x120] sm:$0xff]
    %v129 = vld [vmem:[#allocation5 + $0x128] sm:$0xff]
    %v130 = vld [vmem:[#allocation5 + $0x130] sm:$0xff]
    %v131 = vld [vmem:[#allocation5 + $0x138] sm:$0xff]
    %v132 = vld [vmem:[#allocation5 + $0x140] sm:$0xff]
    %v133 = vld [vmem:[#allocation5 + $0x148] sm:$0xff]
    %v134 = vld [vmem:[#allocation5 + $0x150] sm:$0xff]
    %v135 = vld [vmem:[#allocation5 + $0x158] sm:$0xff]
    %v136 = vld [vmem:[#allocation5 + $0x160] sm:$0xff]
    %v137 = vld [vmem:[#allocation5 + $0x168] sm:$0xff]
    %v138 = vld [vmem:[#allocation5 + $0x170] sm:$0xff]
    %v139 = vld [vmem:[#allocation5 + $0x178] sm:$0xff]
    %v140 = vld [vmem:[#allocation5 + $0x180] sm:$0xff]
    %v141 = vld [vmem:[#allocation5 + $0x188] sm:$0xff]
    %v142 = vld [vmem:[#allocation5 + $0x190] sm:$0xff]
    %v143 = vld [vmem:[#allocation5 + $0x198] sm:$0xff]
    %v144 = vld [vmem:[#allocation5 + $0x1a0] sm:$0xff]
    %v145 = vld [vmem:[#allocation5 + $0x1a8] sm:$0xff]
    %v146 = vld [vmem:[#allocation5 + $0x1b0] sm:$0xff]
    %v147 = vld [vmem:[#allocation5 + $0x1b8] sm:$0xff]
    %v148 = vld [vmem:[#allocation5 + $0x1c0] sm:$0xff]
    %v149 = vld [vmem:[#allocation5 + $0x1c8] sm:$0xff]
    %v150 = vld [vmem:[#allocation5 + $0x1d0] sm:$0xff]
    %v151 = vld [vmem:[#allocation5 + $0x1d8] sm:$0xff]
    %v152 = vld [vmem:[#allocation5 + $0x1e0] sm:$0xff]
    %v153 = vld [vmem:[#allocation5 + $0x1e8] sm:$0xff]
    %v154 = vld [vmem:[#allocation5 + $0x1f0] sm:$0xff]
    %v155 = vld [vmem:[#allocation5 + $0x1f8] sm:$0xff]
    %v156 = vld [vmem:[#allocation7] sm:$0xf]
    %v158 = vlaneseq
    %v159 = vshrl.u32 %v158, 7
    %v160 = vsub.s32 0, %v159
    %v161 = vrot.slane %v156, %v160
    %v162 = vlaneseq
    %v163 = vshrl.u32 %v162, 7
    %v164 = vsub.s32 1, %v163
    %v165 = vrot.slane %v156, %v164
    %v166 = vlaneseq
    %v167 = vshrl.u32 %v166, 7
    %v168 = vsub.s32 2, %v167
    %v169 = vrot.slane %v156, %v168
    %v170 = vlaneseq
    %v171 = vshrl.u32 %v170, 7
    %v172 = vsub.s32 3, %v171
    %v173 = vrot.slane %v156, %v172
    %178 = vmatprep.subr.mxu0 %v153
    %179 = vmatpush1.msra.mxu0 %v152
    %180 = vmatprep.subr.mxu0 %v149
    %181 = vmatpush1.msra.mxu0 %v148
    %182 = vmatprep.subr.mxu0 %v145
    %183 = vmatpush1.msra.mxu0 %v144
    %184 = vmatprep.subr.mxu0 %v141
    %185 = vmatpush1.msra.mxu0 %v140
    %186 = vmatprep.subr.mxu0 %v137
    %187 = vmatpush1.msra.mxu0 %v136
    %188 = vmatprep.subr.mxu0 %v133
    %189 = vmatpush1.msra.mxu0 %v132
    %190 = vmatprep.subr.mxu0 %v129
    %191 = vmatpush1.msra.mxu0 %v128
    %192 = vmatprep.subr.mxu0 %v125
    %193 = vmatpush1.msra.mxu0 %v124
    %194 = vmatprep.subr.mxu0 %v121
    %195 = vmatpush1.msra.mxu0 %v120
    %196 = vmatprep.subr.mxu0 %v117
    %197 = vmatpush1.msra.mxu0 %v116
    %198 = vmatprep.subr.mxu0 %v113
    %199 = vmatpush1.msra.mxu0 %v112
    %200 = vmatprep.subr.mxu0 %v109
    %201 = vmatpush1.msra.mxu0 %v108
    %202 = vmatprep.subr.mxu0 %v105
    %203 = vmatpush1.msra.mxu0 %v104
    %204 = vmatprep.subr.mxu0 %v101
    %205 = vmatpush1.msra.mxu0 %v100
    %206 = vmatprep.subr.mxu0 %v97
    %207 = vmatpush1.msra.mxu0 %v96
    %208 = vmatprep.subr.mxu0 %v93
    %209 = vmatpush1.msra.mxu0 %v92
    %210 = vmatprep.subr.mxu0 0.0
    %211 = vmatpush2.msra.mxu0 0.0
    %212 = vmatprep.subr.mxu0 0.0
    %213 = vmatpush2.msra.mxu0 0.0
    %214 = vmatprep.subr.mxu0 0.0
    %215 = vmatpush2.msra.mxu0 0.0
    %216 = vmatprep.subr.mxu0 0.0
    %217 = vmatpush2.msra.mxu0 0.0
    %218 = vmatprep.subr.mxu0 0.0
    %219 = vmatpush2.msra.mxu0 0.0
    %220 = vmatprep.subr.mxu0 0.0
    %221 = vmatpush2.msra.mxu0 0.0
    %222 = vmatprep.subr.mxu0 0.0
    %223 = vmatpush2.msra.mxu0 0.0
    %224 = vmatprep.subr.mxu0 0.0
    %225 = vmatpush2.msra.mxu0 0.0
    %226 = vmatprep.subr.mxu0 0.0
    %227 = vmatpush2.msra.mxu0 0.0
    %228 = vmatprep.subr.mxu0 0.0
    %229 = vmatpush2.msra.mxu0 0.0
    %230 = vmatprep.subr.mxu0 0.0
    %231 = vmatpush2.msra.mxu0 0.0
    %232 = vmatprep.subr.mxu0 0.0
    %233 = vmatpush2.msra.mxu0 0.0
    %234 = vmatprep.subr.mxu0 0.0
    %235 = vmatpush2.msra.mxu0 0.0
    %236 = vmatprep.subr.mxu0 0.0
    %237 = vmatpush2.msra.mxu0 0.0
    %238 = vmatprep.subr.mxu0 0.0
    %239 = vmatpush2.msra.mxu0 0.0
    %240 = vmatprep.subr.mxu0 0.0
    %241 = vmatpush2.msra.mxu0 0.0
    %242 = vmatprep.mubr.f32.mxu0 0.0
    %243 = vmatmul.mubr.f32.gmra.mxu0 %v91
    %v244 = vpop.f32.mrf.mxu0
    %v245 = vadd.f32 %v161, %v244
    %v246 = vpop.f32.mrf.mxu0
    %v247 = vadd.f32 %v165, %v246
    %248 = vdwg.mxu0
    %249 = vmatprep.subr.mxu0 %v155
    %250 = vmatpush1.msra.mxu0 %v154
    %251 = vmatprep.subr.mxu0 %v151
    %252 = vmatpush1.msra.mxu0 %v150
    %253 = vmatprep.subr.mxu0 %v147
    %254 = vmatpush1.msra.mxu0 %v146
    %255 = vmatprep.subr.mxu0 %v143
    %256 = vmatpush1.msra.mxu0 %v142
    %257 = vmatprep.subr.mxu0 %v139
    %258 = vmatpush1.msra.mxu0 %v138
    %259 = vmatprep.subr.mxu0 %v135
    %260 = vmatpush1.msra.mxu0 %v134
    %261 = vmatprep.subr.mxu0 %v131
    %262 = vmatpush1.msra.mxu0 %v130
    %263 = vmatprep.subr.mxu0 %v127
    %264 = vmatpush1.msra.mxu0 %v126
    %265 = vmatprep.subr.mxu0 %v123
    %266 = vmatpush1.msra.mxu0 %v122
    %267 = vmatprep.subr.mxu0 %v119
    %268 = vmatpush1.msra.mxu0 %v118
    %269 = vmatprep.subr.mxu0 %v115
    %270 = vmatpush1.msra.mxu0 %v114
    %271 = vmatprep.subr.mxu0 %v111
    %272 = vmatpush1.msra.mxu0 %v110
    %273 = vmatprep.subr.mxu0 %v107
    %274 = vmatpush1.msra.mxu0 %v106
    %275 = vmatprep.subr.mxu0 %v103
    %276 = vmatpush1.msra.mxu0 %v102
    %277 = vmatprep.subr.mxu0 %v99
    %278 = vmatpush1.msra.mxu0 %v98
    %279 = vmatprep.subr.mxu0 %v95
    %280 = vmatpush1.msra.mxu0 %v94
    %281 = vmatprep.subr.mxu0 0.0
    %282 = vmatpush2.msra.mxu0 0.0
    %283 = vmatprep.subr.mxu0 0.0
    %284 = vmatpush2.msra.mxu0 0.0
    %285 = vmatprep.subr.mxu0 0.0
    %286 = vmatpush2.msra.mxu0 0.0
    %287 = vmatprep.subr.mxu0 0.0
    %288 = vmatpush2.msra.mxu0 0.0
    %289 = vmatprep.subr.mxu0 0.0
    %290 = vmatpush2.msra.mxu0 0.0
    %291 = vmatprep.subr.mxu0 0.0
    %292 = vmatpush2.msra.mxu0 0.0
    %293 = vmatprep.subr.mxu0 0.0
    %294 = vmatpush2.msra.mxu0 0.0
    %295 = vmatprep.subr.mxu0 0.0
    %296 = vmatpush2.msra.mxu0 0.0
    %297 = vmatprep.subr.mxu0 0.0
    %298 = vmatpush2.msra.mxu0 0.0
    %299 = vmatprep.subr.mxu0 0.0
    %300 = vmatpush2.msra.mxu0 0.0
    %301 = vmatprep.subr.mxu0 0.0
    %302 = vmatpush2.msra.mxu0 0.0
    %303 = vmatprep.subr.mxu0 0.0
    %304 = vmatpush2.msra.mxu0 0.0
    %305 = vmatprep.subr.mxu0 0.0
    %306 = vmatpush2.msra.mxu0 0.0
    %307 = vmatprep.subr.mxu0 0.0
    %308 = vmatpush2.msra.mxu0 0.0
    %309 = vmatprep.subr.mxu0 0.0
    %310 = vmatpush2.msra.mxu0 0.0
    %311 = vmatprep.subr.mxu0 0.0
    %312 = vmatpush2.msra.mxu0 0.0
    %313 = vmatprep.mubr.f32.mxu0 0.0
    %314 = vmatmul.mubr.f32.gmra.mxu0 %v91
    %v315 = vpop.f32.mrf.mxu0
    %v316 = vadd.f32 %v169, %v315
    %v317 = vpop.f32.mrf.mxu0
    %v318 = vadd.f32 %v173, %v317
    %319 = vdwg.mxu0
    %v320 = vmax.f32 %v245, 0.0
    %v321 = vmax.f32 %v247, 0.0
    %v322 = vmax.f32 %v316, 0.0
    %v323 = vmax.f32 %v318, 0.0
    %v324 = vld [vmem:[#allocation8] sm:$0xff]
    %v325 = vld [vmem:[#allocation8 + $0x8] sm:$0xff]
    %v326 = vld [vmem:[#allocation8 + $0x10] sm:$0xff]
    %v327 = vld [vmem:[#allocation8 + $0x18] sm:$0xff]
    %v328 = vld [vmem:[#allocation8 + $0x20] sm:$0xff]
    %v329 = vld [vmem:[#allocation8 + $0x28] sm:$0xff]
    %v330 = vld [vmem:[#allocation8 + $0x30] sm:$0xff]
    %v331 = vld [vmem:[#allocation8 + $0x38] sm:$0xff]
    %v332 = vld [vmem:[#allocation8 + $0x40] sm:$0xff]
    %v333 = vld [vmem:[#allocation8 + $0x48] sm:$0xff]
    %v334 = vld [vmem:[#allocation8 + $0x50] sm:$0xff]
    %v335 = vld [vmem:[#allocation8 + $0x58] sm:$0xff]
    %v336 = vld [vmem:[#allocation8 + $0x60] sm:$0xff]
    %v337 = vld [vmem:[#allocation8 + $0x68] sm:$0xff]
    %v338 = vld [vmem:[#allocation8 + $0x70] sm:$0xff]
    %v339 = vld [vmem:[#allocation8 + $0x78] sm:$0xff]
    %v340 = vld [vmem:[#allocation8 + $0x80] sm:$0xff]
    %v341 = vld [vmem:[#allocation8 + $0x88] sm:$0xff]
    %v342 = vld [vmem:[#allocation8 + $0x90] sm:$0xff]
    %v343 = vld [vmem:[#allocation8 + $0x98] sm:$0xff]
    %v344 = vld [vmem:[#allocation8 + $0xa0] sm:$0xff]
    %v345 = vld [vmem:[#allocation8 + $0xa8] sm:$0xff]
    %v346 = vld [vmem:[#allocation8 + $0xb0] sm:$0xff]
    %v347 = vld [vmem:[#allocation8 + $0xb8] sm:$0xff]
    %v348 = vld [vmem:[#allocation8 + $0xc0] sm:$0xff]
    %v349 = vld [vmem:[#allocation8 + $0xc8] sm:$0xff]
    %v350 = vld [vmem:[#allocation8 + $0xd0] sm:$0xff]
    %v351 = vld [vmem:[#allocation8 + $0xd8] sm:$0xff]
    %v352 = vld [vmem:[#allocation8 + $0xe0] sm:$0xff]
    %v353 = vld [vmem:[#allocation8 + $0xe8] sm:$0xff]
    %v354 = vld [vmem:[#allocation8 + $0xf0] sm:$0xff]
    %v355 = vld [vmem:[#allocation8 + $0xf8] sm:$0xff]
    %v356 = vld [vmem:[#allocation8 + $0x100] sm:$0xff]
    %v357 = vld [vmem:[#allocation8 + $0x108] sm:$0xff]
    %v358 = vld [vmem:[#allocation8 + $0x110] sm:$0xff]
    %v359 = vld [vmem:[#allocation8 + $0x118] sm:$0xff]
    %v360 = vld [vmem:[#allocation8 + $0x120] sm:$0xff]
    %v361 = vld [vmem:[#allocation8 + $0x128] sm:$0xff]
    %v362 = vld [vmem:[#allocation8 + $0x130] sm:$0xff]
    %v363 = vld [vmem:[#allocation8 + $0x138] sm:$0xff]
    %v364 = vld [vmem:[#allocation8 + $0x140] sm:$0xff]
    %v365 = vld [vmem:[#allocation8 + $0x148] sm:$0xff]
    %v366 = vld [vmem:[#allocation8 + $0x150] sm:$0xff]
    %v367 = vld [vmem:[#allocation8 + $0x158] sm:$0xff]
    %v368 = vld [vmem:[#allocation8 + $0x160] sm:$0xff]
    %v369 = vld [vmem:[#allocation8 + $0x168] sm:$0xff]
    %v370 = vld [vmem:[#allocation8 + $0x170] sm:$0xff]
    %v371 = vld [vmem:[#allocation8 + $0x178] sm:$0xff]
    %v372 = vld [vmem:[#allocation8 + $0x180] sm:$0xff]
    %v373 = vld [vmem:[#allocation8 + $0x188] sm:$0xff]
    %v374 = vld [vmem:[#allocation8 + $0x190] sm:$0xff]
    %v375 = vld [vmem:[#allocation8 + $0x198] sm:$0xff]
    %v376 = vld [vmem:[#allocation8 + $0x1a0] sm:$0xff]
    %v377 = vld [vmem:[#allocation8 + $0x1a8] sm:$0xff]
    %v378 = vld [vmem:[#allocation8 + $0x1b0] sm:$0xff]
    %v379 = vld [vmem:[#allocation8 + $0x1b8] sm:$0xff]
    %v380 = vld [vmem:[#allocation8 + $0x1c0] sm:$0xff]
    %v381 = vld [vmem:[#allocation8 + $0x1c8] sm:$0xff]
    %v382 = vld [vmem:[#allocation8 + $0x1d0] sm:$0xff]
    %v383 = vld [vmem:[#allocation8 + $0x1d8] sm:$0xff]
    %v384 = vld [vmem:[#allocation8 + $0x1e0] sm:$0xff]
    %v385 = vld [vmem:[#allocation8 + $0x1e8] sm:$0xff]
    %v386 = vld [vmem:[#allocation8 + $0x1f0] sm:$0xff]
    %v387 = vld [vmem:[#allocation8 + $0x1f8] sm:$0xff]
    %v388 = vld [vmem:[#allocation8 + $0x200] sm:$0xff]
    %v389 = vld [vmem:[#allocation8 + $0x208] sm:$0xff]
    %v390 = vld [vmem:[#allocation8 + $0x210] sm:$0xff]
    %v391 = vld [vmem:[#allocation8 + $0x218] sm:$0xff]
    %v392 = vld [vmem:[#allocation8 + $0x220] sm:$0xff]
    %v393 = vld [vmem:[#allocation8 + $0x228] sm:$0xff]
    %v394 = vld [vmem:[#allocation8 + $0x230] sm:$0xff]
    %v395 = vld [vmem:[#allocation8 + $0x238] sm:$0xff]
    %v396 = vld [vmem:[#allocation8 + $0x240] sm:$0xff]
    %v397 = vld [vmem:[#allocation8 + $0x248] sm:$0xff]
    %v398 = vld [vmem:[#allocation8 + $0x250] sm:$0xff]
    %v399 = vld [vmem:[#allocation8 + $0x258] sm:$0xff]
    %v400 = vld [vmem:[#allocation8 + $0x260] sm:$0xff]
    %v401 = vld [vmem:[#allocation8 + $0x268] sm:$0xff]
    %v402 = vld [vmem:[#allocation8 + $0x270] sm:$0xff]
    %v403 = vld [vmem:[#allocation8 + $0x278] sm:$0xff]
    %v404 = vld [vmem:[#allocation8 + $0x280] sm:$0xff]
    %v405 = vld [vmem:[#allocation8 + $0x288] sm:$0xff]
    %v406 = vld [vmem:[#allocation8 + $0x290] sm:$0xff]
    %v407 = vld [vmem:[#allocation8 + $0x298] sm:$0xff]
    %v408 = vld [vmem:[#allocation8 + $0x2a0] sm:$0xff]
    %v409 = vld [vmem:[#allocation8 + $0x2a8] sm:$0xff]
    %v410 = vld [vmem:[#allocation8 + $0x2b0] sm:$0xff]
    %v411 = vld [vmem:[#allocation8 + $0x2b8] sm:$0xff]
    %v412 = vld [vmem:[#allocation8 + $0x2c0] sm:$0xff]
    %v413 = vld [vmem:[#allocation8 + $0x2c8] sm:$0xff]
    %v414 = vld [vmem:[#allocation8 + $0x2d0] sm:$0xff]
    %v415 = vld [vmem:[#allocation8 + $0x2d8] sm:$0xff]
    %v416 = vld [vmem:[#allocation8 + $0x2e0] sm:$0xff]
    %v417 = vld [vmem:[#allocation8 + $0x2e8] sm:$0xff]
    %v418 = vld [vmem:[#allocation8 + $0x2f0] sm:$0xff]
    %v419 = vld [vmem:[#allocation8 + $0x2f8] sm:$0xff]
    %v420 = vld [vmem:[#allocation8 + $0x300] sm:$0xff]
    %v421 = vld [vmem:[#allocation8 + $0x308] sm:$0xff]
    %v422 = vld [vmem:[#allocation8 + $0x310] sm:$0xff]
    %v423 = vld [vmem:[#allocation8 + $0x318] sm:$0xff]
    %v424 = vld [vmem:[#allocation8 + $0x320] sm:$0xff]
    %v425 = vld [vmem:[#allocation8 + $0x328] sm:$0xff]
    %v426 = vld [vmem:[#allocation8 + $0x330] sm:$0xff]
    %v427 = vld [vmem:[#allocation8 + $0x338] sm:$0xff]
    %v428 = vld [vmem:[#allocation8 + $0x340] sm:$0xff]
    %v429 = vld [vmem:[#allocation8 + $0x348] sm:$0xff]
    %v430 = vld [vmem:[#allocation8 + $0x350] sm:$0xff]
    %v431 = vld [vmem:[#allocation8 + $0x358] sm:$0xff]
    %v432 = vld [vmem:[#allocation8 + $0x360] sm:$0xff]
    %v433 = vld [vmem:[#allocation8 + $0x368] sm:$0xff]
    %v434 = vld [vmem:[#allocation8 + $0x370] sm:$0xff]
    %v435 = vld [vmem:[#allocation8 + $0x378] sm:$0xff]
    %v436 = vld [vmem:[#allocation8 + $0x380] sm:$0xff]
    %v437 = vld [vmem:[#allocation8 + $0x388] sm:$0xff]
    %v438 = vld [vmem:[#allocation8 + $0x390] sm:$0xff]
    %v439 = vld [vmem:[#allocation8 + $0x398] sm:$0xff]
    %v440 = vld [vmem:[#allocation8 + $0x3a0] sm:$0xff]
    %v441 = vld [vmem:[#allocation8 + $0x3a8] sm:$0xff]
    %v442 = vld [vmem:[#allocation8 + $0x3b0] sm:$0xff]
    %v443 = vld [vmem:[#allocation8 + $0x3b8] sm:$0xff]
    %v444 = vld [vmem:[#allocation8 + $0x3c0] sm:$0xff]
    %v445 = vld [vmem:[#allocation8 + $0x3c8] sm:$0xff]
    %v446 = vld [vmem:[#allocation8 + $0x3d0] sm:$0xff]
    %v447 = vld [vmem:[#allocation8 + $0x3d8] sm:$0xff]
    %v448 = vld [vmem:[#allocation8 + $0x3e0] sm:$0xff]
    %v449 = vld [vmem:[#allocation8 + $0x3e8] sm:$0xff]
    %v450 = vld [vmem:[#allocation8 + $0x3f0] sm:$0xff]
    %v451 = vld [vmem:[#allocation8 + $0x3f8] sm:$0xff]
    %v452 = vld [vmem:[%s4] sm:$0x3]
    %v454 = vlaneseq
    %v455 = vshrl.u32 %v454, 7
    %v456 = vsub.s32 0, %v455
    %v457 = vrot.slane %v452, %v456
    %v458 = vlaneseq
    %v459 = vshrl.u32 %v458, 7
    %v460 = vsub.s32 1, %v459
    %v461 = vrot.slane %v452, %v460
    %464 = vmatprep.subr.mxu0 %v355
    %465 = vmatpush1.msra.mxu0 %v354
    %466 = vmatprep.subr.mxu0 %v353
    %467 = vmatpush1.msra.mxu0 %v352
    %468 = vmatprep.subr.mxu0 %v351
    %469 = vmatpush1.msra.mxu0 %v350
    %470 = vmatprep.subr.mxu0 %v349
    %471 = vmatpush1.msra.mxu0 %v348
    %472 = vmatprep.subr.mxu0 %v347
    %473 = vmatpush1.msra.mxu0 %v346
    %474 = vmatprep.subr.mxu0 %v345
    %475 = vmatpush1.msra.mxu0 %v344
    %476 = vmatprep.subr.mxu0 %v343
    %477 = vmatpush1.msra.mxu0 %v342
    %478 = vmatprep.subr.mxu0 %v341
    %479 = vmatpush1.msra.mxu0 %v340
    %480 = vmatprep.subr.mxu0 %v339
    %481 = vmatpush1.msra.mxu0 %v338
    %482 = vmatprep.subr.mxu0 %v337
    %483 = vmatpush1.msra.mxu0 %v336
    %484 = vmatprep.subr.mxu0 %v335
    %485 = vmatpush1.msra.mxu0 %v334
    %486 = vmatprep.subr.mxu0 %v333
    %487 = vmatpush1.msra.mxu0 %v332
    %488 = vmatprep.subr.mxu0 %v331
    %489 = vmatpush1.msra.mxu0 %v330
    %490 = vmatprep.subr.mxu0 %v329
    %491 = vmatpush1.msra.mxu0 %v328
    %492 = vmatprep.subr.mxu0 %v327
    %493 = vmatpush1.msra.mxu0 %v326
    %494 = vmatprep.subr.mxu0 %v325
    %495 = vmatpush1.msra.mxu0 %v324
    %496 = vmatprep.subr.mxu0 %v387
    %497 = vmatpush2.msra.mxu0 %v386
    %498 = vmatprep.subr.mxu0 %v385
    %499 = vmatpush2.msra.mxu0 %v384
    %500 = vmatprep.subr.mxu0 %v383
    %501 = vmatpush2.msra.mxu0 %v382
    %502 = vmatprep.subr.mxu0 %v381
    %503 = vmatpush2.msra.mxu0 %v380
    %504 = vmatprep.subr.mxu0 %v379
    %505 = vmatpush2.msra.mxu0 %v378
    %506 = vmatprep.subr.mxu0 %v377
    %507 = vmatpush2.msra.mxu0 %v376
    %508 = vmatprep.subr.mxu0 %v375
    %509 = vmatpush2.msra.mxu0 %v374
    %510 = vmatprep.subr.mxu0 %v373
    %511 = vmatpush2.msra.mxu0 %v372
    %512 = vmatprep.subr.mxu0 %v371
    %513 = vmatpush2.msra.mxu0 %v370
    %514 = vmatprep.subr.mxu0 %v369
    %515 = vmatpush2.msra.mxu0 %v368
    %516 = vmatprep.subr.mxu0 %v367
    %517 = vmatpush2.msra.mxu0 %v366
    %518 = vmatprep.subr.mxu0 %v365
    %519 = vmatpush2.msra.mxu0 %v364
    %520 = vmatprep.subr.mxu0 %v363
    %521 = vmatpush2.msra.mxu0 %v362
    %522 = vmatprep.subr.mxu0 %v361
    %523 = vmatpush2.msra.mxu0 %v360
    %524 = vmatprep.subr.mxu0 %v359
    %525 = vmatpush2.msra.mxu0 %v358
    %526 = vmatprep.subr.mxu0 %v357
    %527 = vmatpush2.msra.mxu0 %v356
    %528 = vmatprep.mubr.f32.mxu0 %v321
    %529 = vmatmul.mubr.f32.gmra.mxu0 %v320
    %v530 = vpop.f32.mrf.mxu0
    %v531 = vadd.f32 %v457, %v530
    %v532 = vpop.f32.mrf.mxu0
    %v533 = vadd.f32 %v461, %v532
    %534 = vdwg.mxu0
    %535 = vmatprep.subr.mxu0 %v419
    %536 = vmatpush1.msra.mxu0 %v418
    %537 = vmatprep.subr.mxu0 %v417
    %538 = vmatpush1.msra.mxu0 %v416
    %539 = vmatprep.subr.mxu0 %v415
    %540 = vmatpush1.msra.mxu0 %v414
    %541 = vmatprep.subr.mxu0 %v413
    %542 = vmatpush1.msra.mxu0 %v412
    %543 = vmatprep.subr.mxu0 %v411
    %544 = vmatpush1.msra.mxu0 %v410
    %545 = vmatprep.subr.mxu0 %v409
    %546 = vmatpush1.msra.mxu0 %v408
    %547 = vmatprep.subr.mxu0 %v407
    %548 = vmatpush1.msra.mxu0 %v406
    %549 = vmatprep.subr.mxu0 %v405
    %550 = vmatpush1.msra.mxu0 %v404
    %551 = vmatprep.subr.mxu0 %v403
    %552 = vmatpush1.msra.mxu0 %v402
    %553 = vmatprep.subr.mxu0 %v401
    %554 = vmatpush1.msra.mxu0 %v400
    %555 = vmatprep.subr.mxu0 %v399
    %556 = vmatpush1.msra.mxu0 %v398
    %557 = vmatprep.subr.mxu0 %v397
    %558 = vmatpush1.msra.mxu0 %v396
    %559 = vmatprep.subr.mxu0 %v395
    %560 = vmatpush1.msra.mxu0 %v394
    %561 = vmatprep.subr.mxu0 %v393
    %562 = vmatpush1.msra.mxu0 %v392
    %563 = vmatprep.subr.mxu0 %v391
    %564 = vmatpush1.msra.mxu0 %v390
    %565 = vmatprep.subr.mxu0 %v389
    %566 = vmatpush1.msra.mxu0 %v388
    %567 = vmatprep.subr.mxu0 %v451
    %568 = vmatpush2.msra.mxu0 %v450
    %569 = vmatprep.subr.mxu0 %v449
    %570 = vmatpush2.msra.mxu0 %v448
    %571 = vmatprep.subr.mxu0 %v447
    %572 = vmatpush2.msra.mxu0 %v446
    %573 = vmatprep.subr.mxu0 %v445
    %574 = vmatpush2.msra.mxu0 %v444
    %575 = vmatprep.subr.mxu0 %v443
    %576 = vmatpush2.msra.mxu0 %v442
    %577 = vmatprep.subr.mxu0 %v441
    %578 = vmatpush2.msra.mxu0 %v440
    %579 = vmatprep.subr.mxu0 %v439
    %580 = vmatpush2.msra.mxu0 %v438
    %581 = vmatprep.subr.mxu0 %v437
    %582 = vmatpush2.msra.mxu0 %v436
    %583 = vmatprep.subr.mxu0 %v435
    %584 = vmatpush2.msra.mxu0 %v434
    %585 = vmatprep.subr.mxu0 %v433
    %586 = vmatpush2.msra.mxu0 %v432
    %587 = vmatprep.subr.mxu0 %v431
    %588 = vmatpush2.msra.mxu0 %v430
    %589 = vmatprep.subr.mxu0 %v429
    %590 = vmatpush2.msra.mxu0 %v428
    %591 = vmatprep.subr.mxu0 %v427
    %592 = vmatpush2.msra.mxu0 %v426
    %593 = vmatprep.subr.mxu0 %v425
    %594 = vmatpush2.msra.mxu0 %v424
    %595 = vmatprep.subr.mxu0 %v423
    %596 = vmatpush2.msra.mxu0 %v422
    %597 = vmatprep.subr.mxu0 %v421
    %598 = vmatpush2.msra.mxu0 %v420
    %599 = vmatprep.mubr.f32.mxu0 %v323
    %600 = vmatmul.mubr.f32.gmra.mxu0 %v322
    %v601 = vpop.f32.mrf.mxu0
    %v602 = vadd.f32 %v531, %v601
    %v603 = vpop.f32.mrf.mxu0
    %v604 = vadd.f32 %v533, %v603
    %605 = vdwg.mxu0
    %v606 = vmax.f32 %v602, 0.0
    %v607 = vmax.f32 %v604, 0.0
    %v608 = vld [vmem:[#allocation10] sm:$0xff]
    %v609 = vld [vmem:[#allocation10 + $0x8] sm:$0xff]
    %v610 = vld [vmem:[#allocation10 + $0x10] sm:$0xff]
    %v611 = vld [vmem:[#allocation10 + $0x18] sm:$0xff]
    %v612 = vld [vmem:[#allocation10 + $0x20] sm:$0xff]
    %v613 = vld [vmem:[#allocation10 + $0x28] sm:$0xff]
    %v614 = vld [vmem:[#allocation10 + $0x30] sm:$0xff]
    %v615 = vld [vmem:[#allocation10 + $0x38] sm:$0xff]
    %v616 = vld [vmem:[#allocation10 + $0x40] sm:$0xff]
    %v617 = vld [vmem:[#allocation10 + $0x48] sm:$0xff]
    %v618 = vld [vmem:[#allocation10 + $0x50] sm:$0xff]
    %v619 = vld [vmem:[#allocation10 + $0x58] sm:$0xff]
    %v620 = vld [vmem:[#allocation10 + $0x60] sm:$0xff]
    %v621 = vld [vmem:[#allocation10 + $0x68] sm:$0xff]
    %v622 = vld [vmem:[#allocation10 + $0x70] sm:$0xff]
    %v623 = vld [vmem:[#allocation10 + $0x78] sm:$0xff]
    %v624 = vld [vmem:[#allocation10 + $0x80] sm:$0xff]
    %v625 = vld [vmem:[#allocation10 + $0x88] sm:$0xff]
    %v626 = vld [vmem:[#allocation10 + $0x90] sm:$0xff]
    %v627 = vld [vmem:[#allocation10 + $0x98] sm:$0xff]
    %v628 = vld [vmem:[#allocation10 + $0xa0] sm:$0xff]
    %v629 = vld [vmem:[#allocation10 + $0xa8] sm:$0xff]
    %v630 = vld [vmem:[#allocation10 + $0xb0] sm:$0xff]
    %v631 = vld [vmem:[#allocation10 + $0xb8] sm:$0xff]
    %v632 = vld [vmem:[#allocation10 + $0xc0] sm:$0xff]
    %v633 = vld [vmem:[#allocation10 + $0xc8] sm:$0xff]
    %v634 = vld [vmem:[#allocation10 + $0xd0] sm:$0xff]
    %v635 = vld [vmem:[#allocation10 + $0xd8] sm:$0xff]
    %v636 = vld [vmem:[#allocation10 + $0xe0] sm:$0xff]
    %v637 = vld [vmem:[#allocation10 + $0xe8] sm:$0xff]
    %v638 = vld [vmem:[#allocation10 + $0xf0] sm:$0xff]
    %v639 = vld [vmem:[#allocation10 + $0xf8] sm:$0xff]
    %v640 = vld [vmem:[%s6] sm:$0x1]
    %v642 = vlaneseq
    %v643 = vshrl.u32 %v642, 7
    %v644 = vsub.s32 0, %v643
    %v645 = vrot.slane %v640, %v644
    %647 = vmatprep.subr.mxu0 0.0
    %648 = vmatpush1.msra.mxu0 %v623
    %649 = vmatprep.subr.mxu0 0.0
    %650 = vmatpush1.msra.mxu0 %v622
    %651 = vmatprep.subr.mxu0 0.0
    %652 = vmatpush1.msra.mxu0 %v621
    %653 = vmatprep.subr.mxu0 0.0
    %654 = vmatpush1.msra.mxu0 %v620
    %655 = vmatprep.subr.mxu0 0.0
    %656 = vmatpush1.msra.mxu0 %v619
    %657 = vmatprep.subr.mxu0 0.0
    %658 = vmatpush1.msra.mxu0 %v618
    %659 = vmatprep.subr.mxu0 0.0
    %660 = vmatpush1.msra.mxu0 %v617
    %661 = vmatprep.subr.mxu0 0.0
    %662 = vmatpush1.msra.mxu0 %v616
    %663 = vmatprep.subr.mxu0 0.0
    %664 = vmatpush1.msra.mxu0 %v615
    %665 = vmatprep.subr.mxu0 0.0
    %666 = vmatpush1.msra.mxu0 %v614
    %667 = vmatprep.subr.mxu0 0.0
    %668 = vmatpush1.msra.mxu0 %v613
    %669 = vmatprep.subr.mxu0 0.0
    %670 = vmatpush1.msra.mxu0 %v612
    %671 = vmatprep.subr.mxu0 0.0
    %672 = vmatpush1.msra.mxu0 %v611
    %673 = vmatprep.subr.mxu0 0.0
    %674 = vmatpush1.msra.mxu0 %v610
    %675 = vmatprep.subr.mxu0 0.0
    %676 = vmatpush1.msra.mxu0 %v609
    %677 = vmatprep.subr.mxu0 0.0
    %678 = vmatpush1.msra.mxu0 %v608
    %679 = vmatprep.subr.mxu0 0.0
    %680 = vmatpush2.msra.mxu0 %v639
    %681 = vmatprep.subr.mxu0 0.0
    %682 = vmatpush2.msra.mxu0 %v638
    %683 = vmatprep.subr.mxu0 0.0
    %684 = vmatpush2.msra.mxu0 %v637
    %685 = vmatprep.subr.mxu0 0.0
    %686 = vmatpush2.msra.mxu0 %v636
    %687 = vmatprep.subr.mxu0 0.0
    %688 = vmatpush2.msra.mxu0 %v635
    %689 = vmatprep.subr.mxu0 0.0
    %690 = vmatpush2.msra.mxu0 %v634
    %691 = vmatprep.subr.mxu0 0.0
    %692 = vmatpush2.msra.mxu0 %v633
    %693 = vmatprep.subr.mxu0 0.0
    %694 = vmatpush2.msra.mxu0 %v632
    %695 = vmatprep.subr.mxu0 0.0
    %696 = vmatpush2.msra.mxu0 %v631
    %697 = vmatprep.subr.mxu0 0.0
    %698 = vmatpush2.msra.mxu0 %v630
    %699 = vmatprep.subr.mxu0 0.0
    %700 = vmatpush2.msra.mxu0 %v629
    %701 = vmatprep.subr.mxu0 0.0
    %702 = vmatpush2.msra.mxu0 %v628
    %703 = vmatprep.subr.mxu0 0.0
    %704 = vmatpush2.msra.mxu0 %v627
    %705 = vmatprep.subr.mxu0 0.0
    %706 = vmatpush2.msra.mxu0 %v626
    %707 = vmatprep.subr.mxu0 0.0
    %708 = vmatpush2.msra.mxu0 %v625
    %709 = vmatprep.subr.mxu0 0.0
    %710 = vmatpush2.msra.mxu0 %v624
    %711 = vmatprep.mubr.f32.mxu0 %v607
    %712 = vmatmul.mubr.f32.gmra.mxu0 %v606
    %v713 = vpop.f32.mrf.mxu0
    %v714 = vadd.f32 %v645, %v713
    %v715 = vpop.f32.mrf.mxu0
    %716 = vdwg.mxu0
    %717 = vmax.xlane.f32.xlu0 %v714
    %v718 = vpop.xlane.xlu0 %717
    %v719 = vsub.f32 %v714, %v718
    %v720 = vmul.f32 %v719, 1.442695
    %v721 = vpow.pop %v720
    %722 = vadd.xlane.f32.xlu0 %v721
    %v723 = vpop.xlane.xlu0 %722
    %v724 = vrcp.pop %v723
    %v725 = vmul.f32 %v721, %v724
    %726 = vst [vmem:[#allocation11] sm:$0xff] %v725
    // Predicated region
    $region50: #{tpu_custom_call.1} parent=1 // pred_check
      _
    $region51: #{tpu_custom_call.1} parent=1 // pred_check_branch
      %728 = sbr.rel (0) target = $region53
    $region52: #{tpu_custom_call.1} parent=1 // pred_region
      %s730 = ssub.s32 128, 128
      %731 = vsyncadd [#allocation4], %s730
      %s733 = sshll.u32 [#allocation11], 4
      %s734 = int_to_ptr.vmem [resolvable:$true] %s733
      %736 = dma.vmem_to_hbm [thread:$0]  %s734, 128, %s7, [#allocation4]
    $region53: #{tpu_custom_call.1} parent=1 // pred_fallthru
      _
    // Predicated region
    $region54: #{tpu_custom_call.1} parent=1 // pred_check
      _
    $region55: #{tpu_custom_call.1} parent=1 // pred_check_branch
      %738 = sbr.rel (0) target = $region57
    $region56: #{tpu_custom_call.1} parent=1 // pred_region
      %739 = dma.done [#allocation4], 128
    $region57: #{tpu_custom_call.1} parent=1 // pred_fallthru
      _
    %740 = vsyncpa [#allocation3], 1
    %741 = vsyncpa [#allocation6], 1
    %742 = vsyncpa [#allocation9], 1
    %743 = vsyncpa [#allocation4], 1

</llo_original>
